<compile_context>
chip_gen: v6e
topology: v6e:2x2x1
jax: 0.10.0
libtpu: 0.0.40
codegen_flags: <defaults>
</compile_context>

<pallas_src>
import functools

import jax
import jax.numpy as jnp
from jax.experimental import pallas as pl
from jax.experimental.pallas import tpu as pltpu

_LANE = 128


def _round_up(n, m):
    return ((n + m - 1) // m) * m


def _sublane_packing(dtype):
    # sublane packing of one vreg row-group: f32 -> 8, bf16 -> 16, i8/fp8 -> 32
    return max(8, 32 // jnp.dtype(dtype).itemsize)


def _vmem_capacity_bytes():
    try:
        cap = getattr(pltpu.get_tpu_info(), "vmem_capacity_bytes", None)
        if cap:
            return int(cap)
    except Exception:
        pass
    return 64 << 20  # conservative (v7x per-TC physical VMEM)


def _pick_divisor_tile(total, target, unit):
    """Largest multiple of `unit` that divides `total` and is <= max(target, unit)."""
    best = unit
    for k in range(1, total // unit + 1):
        size = k * unit
        if size > max(target, unit):
            break
        if total % size == 0:
            best = size
    return best


# ---------------------------------------------------------------------------
# Kernels
# ---------------------------------------------------------------------------

def _mlp_resident_kernel(x_ref, w1_ref, b1_ref, w2_ref, b2_ref, o_ref):
    # Both weight matrices resident in VMEM; two MXU matmuls fused per x tile.
    x = x_ref[...].astype(w1_ref.dtype)          # cast on the tile (no HBM pass)
    h = jnp.dot(x, w1_ref[...], preferred_element_type=jnp.float32)
    h = jnp.maximum(h + b1_ref[...], 0.0)        # f32 bias + ReLU on the VPU
    y = jnp.dot(h.astype(w2_ref.dtype), w2_ref[...],
                preferred_element_type=jnp.float32)
    o_ref[...] = (y + b2_ref[...]).astype(o_ref.dtype)


def _mlp_stream_kernel(x_ref, w1_ref, b1_ref, w2_ref, b2_ref, o_ref, acc_ref):
    # Weights streamed in H-tiles; f32 accumulator carried across the k axis.
    k = pl.program_id(1)

    @pl.when(k == 0)
    def _():
        acc_ref[...] = jnp.zeros_like(acc_ref)

    x = x_ref[...].astype(w1_ref.dtype)
    h = jnp.dot(x, w1_ref[...], preferred_element_type=jnp.float32)
    h = jnp.maximum(h + b1_ref[...], 0.0)
    acc_ref[...] += jnp.dot(h.astype(w2_ref.dtype), w2_ref[...],
                            preferred_element_type=jnp.float32)

    @pl.when(k == pl.num_programs(1) - 1)
    def _():
        o_ref[...] = (acc_ref[...] + b2_ref[...]).astype(o_ref.dtype)


# ---------------------------------------------------------------------------
# Param prep (once per parameter set) and forward
# ---------------------------------------------------------------------------

def prepare_params(w1, b1, w2, b2, *, mxu_dtype=jnp.bfloat16):
    """One-time weight prep: cast to the MXU operand dtype and lane-pad H/D_out.

    Zero padding is exact: padded hidden units get bias 0 -> ReLU 0 -> multiply
    zero rows of W2; padded output columns are sliced off in buri_forward.
    D_in is intentionally NOT padded (x stays untouched per call).
    """
    D_in, H = w1.shape
    D_out = w2.shape[1]
    H_p = _round_up(H, _LANE)
    D_out_p = _round_up(D_out, _LANE)
    w1p = jnp.zeros((D_in, H_p), mxu_dtype).at[:, :H].set(w1.astype(mxu_dtype))
    b1p = jnp.zeros((1, H_p), jnp.float32).at[:, :H].set(
        b1.reshape(1, H).astype(jnp.float32))
    w2p = jnp.zeros((H_p, D_out_p), mxu_dtype).at[:H, :D_out].set(w2.astype(mxu_dtype))
    b2p = jnp.zeros((1, D_out_p), jnp.float32).at[:, :D_out].set(
        b2.reshape(1, D_out).astype(jnp.float32))
    return dict(w1=w1p, b1=b1p, w2=w2p, b2=b2p, d_in=D_in, h=H, d_out=D_out)


def buri_forward(x, params, *, tile_m=None, tile_h=None, force_stream=False):
    """Fused MLP forward: relu(x @ W1 + b1) @ W2 + b2.

    x : [M, D_in] (any float dtype); params from prepare_params().
    """
    M, D_in = x.shape
    assert D_in == params["d_in"], "input feature dim mismatch"
    w1p, b1p, w2p, b2p = params["w1"], params["b1"], params["w2"], params["b2"]
    H_p, D_out_p = w1p.shape[1], w2p.shape[1]
    D_out = params["d_out"]
    mxu_dtype = w1p.dtype
    out_dtype = x.dtype
    mxu_bytes = jnp.dtype(mxu_dtype).itemsize
    x_bytes = jnp.dtype(x.dtype).itemsize
    out_bytes = jnp.dtype(out_dtype).itemsize

    vmem_cap = _vmem_capacity_bytes()
    big_vmem = vmem_cap >= (96 << 20)            # v5e/v6e (128 MiB) vs v7x (64 MiB)
    max_tile_m = 512 if big_vmem else 256
    packing = _sublane_packing(mxu_dtype)

    if tile_m is None:
        if M <= 2 * max_tile_m:
            # target >=4 grid steps so the "parallel" axis spans both v7x TCs
            tile_m = max(packing, _round_up(pl.cdiv(M, 4), packing))
        else:
            tile_m = max_tile_m
    else:
        tile_m = max(packing, _round_up(tile_m, packing))

    M_p = _round_up(M, tile_m)
    xk = x if M_p == M else jnp.zeros((M_p, D_in), x.dtype).at[:M].set(x)

    weight_bytes = (w1p.size + w2p.size) * mxu_bytes
    resident_cap = (64 << 20) if big_vmem else (24 << 20)
    use_stream = force_stream or weight_bytes > resident_cap

    if not use_stream:
        # --- resident-weight path: grid over batch tiles only ---------------
        need = (weight_bytes + (H_p + D_out_p) * 4
                + 2 * tile_m * D_in * x_bytes
                + 2 * tile_m * D_out_p * out_bytes
                + tile_m * H_p * 4)
        resident = functools.partial(pl.BlockSpec, pipeline_mode=pl.Buffered(1))
        grid = (M_p // tile_m,)
        in_specs = [
            pl.BlockSpec((tile_m, D_in), lambda i: (i, 0)),      # x tile (2-buf)
            resident((D_in, H_p), lambda i: (0, 0)),             # W1 resident
            resident((1, H_p), lambda i: (0, 0)),                # b1
            resident((H_p, D_out_p), lambda i: (0, 0)),          # W2 resident
            resident((1, D_out_p), lambda i: (0, 0)),            # b2
        ]
        out_specs = pl.BlockSpec((tile_m, D_out_p), lambda i: (i, 0))
        scratch = []
        kernel = _mlp_resident_kernel
        dim_sem = ("parallel",)
    else:
        # --- streaming path: weights tiled along H, f32 accumulator ---------
        target_h = 512 if tile_h is None else _round_up(tile_h, _LANE)
        tile_h = _pick_divisor_tile(H_p, target_h, _LANE)
        need = (2 * D_in * tile_h * mxu_bytes
                + 2 * tile_h * D_out_p * mxu_bytes
                + 2 * tile_h * 4 + D_out_p * 4
                + 2 * tile_m * D_in * x_bytes
                + 2 * tile_m * D_out_p * out_bytes
                + tile_m * D_out_p * 4                     # acc scratch
                + tile_m * tile_h * 4)                     # f32 intermediate h
        grid = (M_p // tile_m, H_p // tile_h)
        in_specs = [
            pl.BlockSpec((tile_m, D_in), lambda i, k: (i, 0)),   # x tile (reused over k)
            pl.BlockSpec((D_in, tile_h), lambda i, k: (0, k)),   # W1 H-tile (streamed)
            pl.BlockSpec((1, tile_h), lambda i, k: (0, k)),      # b1 H-tile
            pl.BlockSpec((tile_h, D_out_p), lambda i, k: (k, 0)),  # W2 H-tile (streamed)
            pl.BlockSpec((1, D_out_p), lambda i, k: (0, 0),
                         pipeline_mode=pl.Buffered(1)),          # b2 resident
        ]
        out_specs = pl.BlockSpec((tile_m, D_out_p), lambda i, k: (i, 0))
        scratch = [pltpu.VMEM((tile_m, D_out_p), jnp.float32)]
        kernel = _mlp_stream_kernel
        dim_sem = ("parallel", "arbitrary")

    # VMEM limit: sized from actual need, capped below the chip's capacity.
    hard_cap = max(32 << 20, vmem_cap - (8 << 20))
    vmem_limit = int(min(max(need + (4 << 20), 32 << 20), hard_cap))

    # CostEstimate from true (unpadded) dims so XLA scheduling isn't skewed.
    H = params["h"]
    flops = 2 * M * (D_in * H + H * D_out)
    bytes_accessed = (M * D_in * x_bytes + weight_bytes + (H_p + D_out_p) * 4
                      + M * D_out * out_bytes)
    cost = pl.CostEstimate(flops=flops, transcendentals=0,
                           bytes_accessed=bytes_accessed)

    yp = pl.pallas_call(
        kernel,
        out_shape=jax.ShapeDtypeStruct((M_p, D_out_p), out_dtype),
        grid_spec=pltpu.PrefetchScalarGridSpec(
            num_scalar_prefetch=0,
            grid=grid,
            in_specs=in_specs,
            out_specs=out_specs,
            scratch_shapes=scratch,
        ),
        compiler_params=pltpu.CompilerParams(
            dimension_semantics=dim_sem,
            vmem_limit_bytes=vmem_limit,
        ),
        cost_estimate=cost,
    )(xk, w1p, b1p, w2p, b2p)

    if M_p != M or D_out_p != D_out:
        yp = yp[:M, :D_out]
    return yp


def init_params(key, input_size, hidden_size, output_size, dtype=jnp.float32):
    """Deterministic PyTorch-Linear-style init (uniform +/- 1/sqrt(fan_in))."""
    k1, k2, k3, k4 = jax.random.split(key, 4)
    lim1 = 1.0 / (input_size ** 0.5)
    lim2 = 1.0 / (hidden_size ** 0.5)
    w1 = jax.random.uniform(k1, (input_size, hidden_size), dtype, -lim1, lim1)
    b1 = jax.random.uniform(k2, (1, hidden_size), dtype, -lim1, lim1)
    w2 = jax.random.uniform(k3, (hidden_size, output_size), dtype, -lim2, lim2)
    b2 = jax.random.uniform(k4, (1, output_size), dtype, -lim2, lim2)
    return w1, b1, w2, b2


if __name__ == "__main__":
    key = jax.random.PRNGKey(0)
    kx, kp = jax.random.split(key)

    # Batch large enough for multiple grid steps; feature dims intentionally
    # non-multiples of 128 to exercise once-only lane padding of the weights.
    batch, input_size, hidden_size, output_size = 512, 32, 64, 16
    x = jax.random.normal(kx, (batch, input_size), jnp.float32)
    w1, b1, w2, b2 = init_params(kp, input_size, hidden_size, output_size)
    ref = jnp.maximum(x @ w1 + b1, 0.0) @ w2 + b2

    # 1) f32 MXU operands, resident-weight path (tight check).
    p32 = prepare_params(w1, b1, w2, b2, mxu_dtype=jnp.float32)
    y = jax.block_until_ready(buri_forward(x, p32))
    assert y.shape == (batch, output_size)
    assert jnp.allclose(y, ref, atol=1e-4, rtol=1e-4)

    # 2) default bf16 MXU operands, f32 accumulation (loose check vs f32 ref).
    pbf = prepare_params(w1, b1, w2, b2)
    ybf = jax.block_until_ready(buri_forward(x, pbf))
    assert ybf.shape == (batch, output_size)
    assert jnp.allclose(ybf, ref, atol=1e-1, rtol=1e-1)

    # 3) streaming (H-tiled) fallback with the f32 VMEM accumulator, forced on
    #    a larger hidden size so the reduction grid axis has 2 steps.
    hidden2 = 256
    w1b, b1b, w2b, b2b = init_params(kp, input_size, hidden2, output_size)
    ref2 = jnp.maximum(x @ w1b + b1b, 0.0) @ w2b + b2b
    p2 = prepare_params(w1b, b1b, w2b, b2b, mxu_dtype=jnp.float32)
    y2 = jax.block_until_ready(buri_forward(x, p2, force_stream=True, tile_h=128))
    assert y2.shape == (batch, output_size)
    assert jnp.allclose(y2, ref2, atol=1e-3, rtol=1e-3)

    print("KERNEL_OK")
</pallas_src>

<mosaic_0001>
module attributes {stable_mosaic.version = 11 : i64} {
  func.func @_mlp_resident_kernel(%arg0: i32, %arg1: memref<128x32xf32, #tpu.memory_space<vmem>>, %arg2: memref<32x128xf32, #tpu.memory_space<vmem>>, %arg3: memref<1x128xf32, #tpu.memory_space<vmem>>, %arg4: memref<128x128xf32, #tpu.memory_space<vmem>>, %arg5: memref<1x128xf32, #tpu.memory_space<vmem>>, %arg6: memref<128x128xf32, #tpu.memory_space<vmem>>) attributes {dimension_semantics = [#tpu.dimension_semantics<parallel>], iteration_bounds = array<i64: 4>, scalar_prefetch = 0 : i64, scratch_operands = 0 : i64, tpu.core_type = #tpu.core_type<tc>, window_params = [{transform_indices = @transform_0, window_bounds = array<i64: 128, 32>}, {pipeline_mode = #tpu.pipeline_mode<synchronous>, transform_indices = @transform_1, window_bounds = array<i64: 32, 128>}, {pipeline_mode = #tpu.pipeline_mode<synchronous>, transform_indices = @transform_2, window_bounds = array<i64: 1, 128>}, {pipeline_mode = #tpu.pipeline_mode<synchronous>, transform_indices = @transform_3, window_bounds = array<i64: 128, 128>}, {pipeline_mode = #tpu.pipeline_mode<synchronous>, transform_indices = @transform_4, window_bounds = array<i64: 1, 128>}, {transform_indices = @transform_5, window_bounds = array<i64: 128, 128>}]} {
    %c0 = arith.constant 0 : index
    %c0_0 = arith.constant 0 : index
    %0 = vector.load %arg1[%c0, %c0_0] : memref<128x32xf32, #tpu.memory_space<vmem>>, vector<128x32xf32>
    %c0_1 = arith.constant 0 : index
    %c0_2 = arith.constant 0 : index
    %1 = vector.load %arg2[%c0_1, %c0_2] : memref<32x128xf32, #tpu.memory_space<vmem>>, vector<32x128xf32>
    %cst = arith.constant dense<0.000000e+00> : vector<128x128xf32>
    %2 = tpu.matmul %0, %1, %cst {dimension_numbers = #tpu.dot_dimension_numbers<[1], [0], [0], [1], [0, 0, 1, 1], [], []>} : vector<128x32xf32>, vector<32x128xf32>, vector<128x128xf32> -> vector<128x128xf32>
    %c0_3 = arith.constant 0 : index
    %c0_4 = arith.constant 0 : index
    %3 = vector.load %arg3[%c0_3, %c0_4] : memref<1x128xf32, #tpu.memory_space<vmem>>, vector<1x128xf32>
    %4 = vector.broadcast %3 : vector<1x128xf32> to vector<128x128xf32>
    %5 = arith.addf %2, %4 : vector<128x128xf32>
    %cst_5 = arith.constant 0.000000e+00 : f32
    %6 = vector.broadcast %cst_5 : f32 to vector<128x128xf32>
    %7 = arith.maximumf %5, %6 : vector<128x128xf32>
    %c0_6 = arith.constant 0 : index
    %c0_7 = arith.constant 0 : index
    %8 = vector.load %arg4[%c0_6, %c0_7] : memref<128x128xf32, #tpu.memory_space<vmem>>, vector<128x128xf32>
    %cst_8 = arith.constant dense<0.000000e+00> : vector<128x128xf32>
    %9 = tpu.matmul %7, %8, %cst_8 {dimension_numbers = #tpu.dot_dimension_numbers<[1], [0], [0], [1], [0, 0, 1, 1], [], []>} : vector<128x128xf32>, vector<128x128xf32>, vector<128x128xf32> -> vector<128x128xf32>
    %c0_9 = arith.constant 0 : index
    %c0_10 = arith.constant 0 : index
    %10 = vector.load %arg5[%c0_9, %c0_10] : memref<1x128xf32, #tpu.memory_space<vmem>>, vector<1x128xf32>
    %11 = vector.broadcast %10 : vector<1x128xf32> to vector<128x128xf32>
    %12 = arith.addf %9, %11 : vector<128x128xf32>
    %c0_11 = arith.constant 0 : index
    %c0_12 = arith.constant 0 : index
    %13 = vector.load %arg6[%c0_11, %c0_12] : memref<128x128xf32, #tpu.memory_space<vmem>>, vector<128x128xf32>
    tpu.vector_store %arg6[%c0_11, %c0_12], %12 {strides = array<i32>} : memref<128x128xf32, #tpu.memory_space<vmem>>, vector<128x128xf32>,
    return
  }
  func.func @transform_0(%arg0: i32) -> (i32, i32) {
    %c0_i32 = arith.constant 0 : i32
    %c0_i32_0 = arith.constant 0 : i32
    return %arg0, %c0_i32 : i32, i32
  }
  func.func @transform_1(%arg0: i32) -> (i32, i32) {
    %c0_i32 = arith.constant 0 : i32
    %c0_i32_0 = arith.constant 0 : i32
    %c0_i32_1 = arith.constant 0 : i32
    return %c0_i32, %c0_i32_0 : i32, i32
  }
  func.func @transform_2(%arg0: i32) -> (i32, i32) {
    %c0_i32 = arith.constant 0 : i32
    %c0_i32_0 = arith.constant 0 : i32
    %c0_i32_1 = arith.constant 0 : i32
    return %c0_i32, %c0_i32_0 : i32, i32
  }
  func.func @transform_3(%arg0: i32) -> (i32, i32) {
    %c0_i32 = arith.constant 0 : i32
    %c0_i32_0 = arith.constant 0 : i32
    %c0_i32_1 = arith.constant 0 : i32
    return %c0_i32, %c0_i32_0 : i32, i32
  }
  func.func @transform_4(%arg0: i32) -> (i32, i32) {
    %c0_i32 = arith.constant 0 : i32
    %c0_i32_0 = arith.constant 0 : i32
    %c0_i32_1 = arith.constant 0 : i32
    return %c0_i32, %c0_i32_0 : i32, i32
  }
  func.func @transform_5(%arg0: i32) -> (i32, i32) {
    %c0_i32 = arith.constant 0 : i32
    %c0_i32_0 = arith.constant 0 : i32
    return %arg0, %c0_i32 : i32, i32
  }
}

</mosaic_0001>

<llo_original>
// kernel: tpu_custom_call.1
$region0: #{tpu_custom_call.1}
  #allocation0 [shape = 'u32[]', space=smem, size = 0x4, offset = 0x4, fixed_abs, tag = 'smem constant byte address 0x4 - core index']
  #allocation1 [shape = 'u32[144,128]{1,0:T(1,128)}', space=vmem, size = 0x12000, scoped, tag = 'internal scratch']
  %s0 = inlined_call_operand.vmem [shape: f32[512,32], index: 0, kind: input, shape index: {}]
  %s1 = inlined_call_operand.vmem [shape: f32[32,128], index: 1, kind: input, shape index: {}]
  %s2 = inlined_call_operand.vmem [shape: f32[1,128], index: 2, kind: input, shape index: {}]
  %s3 = inlined_call_operand.vmem [shape: f32[128,128], index: 3, kind: input, shape index: {}]
  %s4 = inlined_call_operand.vmem [shape: f32[1,128], index: 4, kind: input, shape index: {}]
  %s5 = inlined_call_operand.hbm [shape: f32[512,128], index: 5, kind: output, shape index: {}]
  %s6 = sld [smem:[#allocation0]]
  $region53: #{tpu_custom_call.1} parent=0
    _
  %s8 = ssub.s32 1, %s6
  %s9 = scalar_select 0, %s8, %s6
  $region1: #{tpu_custom_call.1} parent=0
    #allocation2 [shape = 'u8[131072]{0}', space=vmem, size = 0x20000, scoped, tag = 'output window, operand 0']
    #allocation3 [shape = 's32[2]{0}', space=sflag, size = 0x8, scoped, tag = 'scoped memory for tpu_custom_call.1']
    %10 = vsyncpa [#allocation3], 0
    %s11 = scalar_lea.sflag [#allocation3], 1
    %12 = vsyncpa %s11, 0
    loop: start=0, step=1, limit=6
    $region2: #{tpu_custom_call.1} parent=1 // loop_pre_header
      _
    $region3: #{tpu_custom_call.1} parent=1 // loop_header
      %s14 = sphi 0, %s18
      %p15 = scmp.ge.s32.totalorder %s14, 6
      %s24 = sphi 0, %s26
      %s27 = sphi 0, %s24
      %s28 = sphi 0, %s27
      %s44 = sphi 0, %s28
      %s48 = sphi 0, %s48
      %s50 = sphi 0, %s48
      %s51 = sphi 0, %s50
      %s65 = sphi 0, %s51
      %s69 = sphi 0, %s69
      %s71 = sphi 0, %s69
      %s72 = sphi 0, %s71
      %s86 = sphi 0, %s72
      %s90 = sphi 0, %s90
      %s92 = sphi 0, %s90
      %s93 = sphi 0, %s92
      %s107 = sphi 0, %s93
      %s111 = sphi 0, %s111
      %s113 = sphi 0, %s111
      %s114 = sphi 0, %s113
      %s128 = sphi 0, %s114
      %s134 = sphi 0, %s136
      %s137 = sphi 0, %s134
      %s138 = sphi 0, %s137
      %s154 = sphi 0, %s138
    $region4: #{tpu_custom_call.1} parent=1 // loop_header_branch
      %17 = sbr.rel (%p15) target = $region8
    $region5: #{tpu_custom_call.1} parent=1 // loop_body
      %s19 = ssub.s32 %s14, 1
      %s20 = ssub.s32 %s14, 2
      %s21 = sadd.s32 %s14, 1
      %s22 = ssub.s32 %s14, %s21
      %p23 = scmp.eq.s32.totalorder %s22, 0
      %s25 = sadd.s32 %s24, 1
      %s26 = scalar_select %p23, %s24, %s25
      %p29 = pneg %p23
      %p30 = scmp.eq.s32.totalorder %s14, 3
      %p31 = por %p29, %p30
      %p32 = scmp.ne.s32.totalorder %s24, %s27
      %p33 = scmp.eq.s32.totalorder %s14, 0
      %p34 = por %p32, %p33
      %p35 = scmp.ne.s32.totalorder %s24, %s27
      %p36 = scmp.eq.s32.totalorder %s19, 3
      %p37 = por %p35, %p36
      %p38 = scmp.ne.s32.totalorder %s27, %s28
      %p39 = scmp.eq.s32.totalorder %s19, 0
      %p40 = por %p38, %p39
      %p41 = scmp.ne.s32.totalorder %s27, %s28
      %p42 = scmp.eq.s32.totalorder %s20, 3
      %p43 = por %p41, %p42
      %p45 = scmp.ne.s32.totalorder %s28, %s44
      %p46 = scmp.eq.s32.totalorder %s20, 0
      %p47 = por %p45, %p46
      %s49 = sadd.s32 %s48, 1
      %p52 = scmp.eq.s32.totalorder %s14, 3
      %p53 = scmp.ne.s32.totalorder %s48, %s50
      %p54 = scmp.eq.s32.totalorder %s14, 0
      %p55 = por %p53, %p54
      %p56 = scmp.ne.s32.totalorder %s48, %s50
      %p57 = scmp.eq.s32.totalorder %s19, 3
      %p58 = por %p56, %p57
      %p59 = scmp.ne.s32.totalorder %s50, %s51
      %p60 = scmp.eq.s32.totalorder %s19, 0
      %p61 = por %p59, %p60
      %p62 = scmp.ne.s32.totalorder %s50, %s51
      %p63 = scmp.eq.s32.totalorder %s20, 3
      %p64 = por %p62, %p63
      %p66 = scmp.ne.s32.totalorder %s51, %s65
      %p67 = scmp.eq.s32.totalorder %s20, 0
      %p68 = por %p66, %p67
      %s70 = sadd.s32 %s69, 1
      %p73 = scmp.eq.s32.totalorder %s14, 3
      %p74 = scmp.ne.s32.totalorder %s69, %s71
      %p75 = scmp.eq.s32.totalorder %s14, 0
      %p76 = por %p74, %p75
      %p77 = scmp.ne.s32.totalorder %s69, %s71
      %p78 = scmp.eq.s32.totalorder %s19, 3
      %p79 = por %p77, %p78
      %p80 = scmp.ne.s32.totalorder %s71, %s72
      %p81 = scmp.eq.s32.totalorder %s19, 0
      %p82 = por %p80, %p81
      %p83 = scmp.ne.s32.totalorder %s71, %s72
      %p84 = scmp.eq.s32.totalorder %s20, 3
      %p85 = por %p83, %p84
      %p87 = scmp.ne.s32.totalorder %s72, %s86
      %p88 = scmp.eq.s32.totalorder %s20, 0
      %p89 = por %p87, %p88
      %s91 = sadd.s32 %s90, 1
      %p94 = scmp.eq.s32.totalorder %s14, 3
      %p95 = scmp.ne.s32.totalorder %s90, %s92
      %p96 = scmp.eq.s32.totalorder %s14, 0
      %p97 = por %p95, %p96
      %p98 = scmp.ne.s32.totalorder %s90, %s92
      %p99 = scmp.eq.s32.totalorder %s19, 3
      %p100 = por %p98, %p99
      %p101 = scmp.ne.s32.totalorder %s92, %s93
      %p102 = scmp.eq.s32.totalorder %s19, 0
      %p103 = por %p101, %p102
      %p104 = scmp.ne.s32.totalorder %s92, %s93
      %p105 = scmp.eq.s32.totalorder %s20, 3
      %p106 = por %p104, %p105
      %p108 = scmp.ne.s32.totalorder %s93, %s107
      %p109 = scmp.eq.s32.totalorder %s20, 0
      %p110 = por %p108, %p109
      %s112 = sadd.s32 %s111, 1
      %p115 = scmp.eq.s32.totalorder %s14, 3
      %p116 = scmp.ne.s32.totalorder %s111, %s113
      %p117 = scmp.eq.s32.totalorder %s14, 0
      %p118 = por %p116, %p117
      %p119 = scmp.ne.s32.totalorder %s111, %s113
      %p120 = scmp.eq.s32.totalorder %s19, 3
      %p121 = por %p119, %p120
      %p122 = scmp.ne.s32.totalorder %s113, %s114
      %p123 = scmp.eq.s32.totalorder %s19, 0
      %p124 = por %p122, %p123
      %p125 = scmp.ne.s32.totalorder %s113, %s114
      %p126 = scmp.eq.s32.totalorder %s20, 3
      %p127 = por %p125, %p126
      %p129 = scmp.ne.s32.totalorder %s114, %s128
      %p130 = scmp.eq.s32.totalorder %s20, 0
      %p131 = por %p129, %p130
      %s132 = ssub.s32 %s14, %s21
      %p133 = scmp.eq.s32.totalorder %s132, 0
      %s135 = sadd.s32 %s134, 1
      %s136 = scalar_select %p133, %s134, %s135
      %p139 = pneg %p133
      %p140 = scmp.eq.s32.totalorder %s14, 3
      %p141 = por %p139, %p140
      %p142 = scmp.ne.s32.totalorder %s134, %s137
      %p143 = scmp.eq.s32.totalorder %s14, 0
      %p144 = por %p142, %p143
      %p145 = scmp.ne.s32.totalorder %s134, %s137
      %p146 = scmp.eq.s32.totalorder %s19, 3
      %p147 = por %p145, %p146
      %p148 = scmp.ne.s32.totalorder %s137, %s138
      %p149 = scmp.eq.s32.totalorder %s19, 0
      %p150 = por %p148, %p149
      %p151 = scmp.ne.s32.totalorder %s137, %s138
      %p152 = scmp.eq.s32.totalorder %s20, 3
      %p153 = por %p151, %p152
      %p155 = scmp.ne.s32.totalorder %s138, %s154
      %p156 = scmp.eq.s32.totalorder %s20, 0
      %p157 = por %p155, %p156
      %p158 = scmp.le.s32.totalorder 1, %s14
      %p159 = scmp.lt.s32.totalorder %s14, 5
      %p160 = pnand %p158, %p159
      %p161 = pneg %p160
      // Predicated region
      $region9: #{tpu_custom_call.1} parent=5 // pred_check
        _
      $region10: #{tpu_custom_call.1} parent=5 // pred_check_branch
        %163 = sbr.rel (%p160) target = $region12
      $region11: #{tpu_custom_call.1} parent=5 // pred_region
        %s164 = ssub.s32 %s14, 1
        // Predicated region
        $region13: #{tpu_custom_call.1} parent=11 // pred_check
          %p165 = pneg %p61
        $region14: #{tpu_custom_call.1} parent=11 // pred_check_branch
          %167 = sbr.rel (%p165) target = $region16
        $region15: #{tpu_custom_call.1} parent=11 // pred_region
          _
        $region16: #{tpu_custom_call.1} parent=11 // pred_fallthru
          _
        // Predicated region
        $region17: #{tpu_custom_call.1} parent=11 // pred_check
          %p168 = pneg %p82
        $region18: #{tpu_custom_call.1} parent=11 // pred_check_branch
          %170 = sbr.rel (%p168) target = $region20
        $region19: #{tpu_custom_call.1} parent=11 // pred_region
          _
        $region20: #{tpu_custom_call.1} parent=11 // pred_fallthru
          _
        // Predicated region
        $region21: #{tpu_custom_call.1} parent=11 // pred_check
          %p171 = pneg %p103
        $region22: #{tpu_custom_call.1} parent=11 // pred_check_branch
          %173 = sbr.rel (%p171) target = $region24
        $region23: #{tpu_custom_call.1} parent=11 // pred_region
          _
        $region24: #{tpu_custom_call.1} parent=11 // pred_fallthru
          _
        // Predicated region
        $region25: #{tpu_custom_call.1} parent=11 // pred_check
          %p174 = pneg %p124
        $region26: #{tpu_custom_call.1} parent=11 // pred_check_branch
          %176 = sbr.rel (%p174) target = $region28
        $region27: #{tpu_custom_call.1} parent=11 // pred_region
          _
        $region28: #{tpu_custom_call.1} parent=11 // pred_fallthru
          _
      $region12: #{tpu_custom_call.1} parent=5 // pred_fallthru
        _
      %p177 = scmp.lt.s32.totalorder %s14, 4
      // Predicated region
      $region29: #{tpu_custom_call.1} parent=5 // pred_check
        %p178 = pneg %p177
      $region30: #{tpu_custom_call.1} parent=5 // pred_check_branch
        %180 = sbr.rel (%p178) target = $region32
      $region31: #{tpu_custom_call.1} parent=5 // pred_region
        // Predicated region
        $region33: #{tpu_custom_call.1} parent=31 // pred_check
          %p181 = pneg %p34
        $region34: #{tpu_custom_call.1} parent=31 // pred_check_branch
          %183 = sbr.rel (%p181) target = $region36
        $region35: #{tpu_custom_call.1} parent=31 // pred_region
          %s184 = smul.u32 16, %s14
          %p185 = scmp.lt.s32.totalorder %s184, 63
          %s186 = scalar_select %p185, %s184, 63
          %s187 = smul.addr %s186, 8
          %s188 = scalar_lea.vmem %s0, %s187
          %s189 = smul.u32 16, %s14
        $region36: #{tpu_custom_call.1} parent=31 // pred_fallthru
          _
      $region32: #{tpu_custom_call.1} parent=5 // pred_fallthru
        _
      %p190 = scmp.le.s32.totalorder 1, %s14
      %p191 = scmp.lt.s32.totalorder %s14, 5
      %p192 = pnand %p190, %p191
      %p193 = pneg %p192
      // Predicated region
      $region37: #{tpu_custom_call.1} parent=5 // pred_check
        _
      $region38: #{tpu_custom_call.1} parent=5 // pred_check_branch
        %195 = sbr.rel (%p192) target = $region40
      $region39: #{tpu_custom_call.1} parent=5 // pred_region
        %s196 = ssub.s32 %s14, 1
        %s197 = smul.u32 16, %s19
        %p198 = scmp.lt.s32.totalorder %s197, 63
        %s199 = scalar_select %p198, %s197, 63
        %s200 = smul.addr %s199, 8
        %s201 = scalar_lea.vmem %s0, %s200
        %p202 = pneg %p40
        %p203 = pneg %p37
        %p204 = pneg %p61
        %p205 = pneg %p58
        %p206 = pneg %p82
        %p207 = pneg %p79
        %p208 = pneg %p103
        %p209 = pneg %p100
        %p210 = pneg %p124
        %p211 = pneg %p121
        %p212 = pneg %p150
        %p213 = pneg %p147
        %s214 = sand.u32 %s137, 1
        %s215 = scalar_lea.sflag [#allocation3], %s214
        %s216 = sand.u32 %s137, 1
        %s217 = smul.addr %s216, 128
        %s218 = scalar_lea.vmem [#allocation2], %s217
        %s219 = smul.u32 16, %s19
        %p220 = scmp.lt.s32.totalorder %s219, 63
        %s221 = scalar_select %p220, %s219, 63
        %s222 = smul.addr %s221, 8
        %s223 = scalar_lea.vmem %s0, %s222
        %s224 = smul.u32 16, %s19
        %s225 = smul.u32 16, %s19
        %v226 = vld [vmem:[%s223] sm:$0xff]
        %v227 = vld [vmem:[%s223 + $0x8] sm:$0xff]
        %v228 = vld [vmem:[%s223 + $0x10] sm:$0xff]
        %v229 = vld [vmem:[%s223 + $0x18] sm:$0xff]
        %v230 = vld [vmem:[%s223 + $0x20] sm:$0xff]
        %v231 = vld [vmem:[%s223 + $0x28] sm:$0xff]
        %v232 = vld [vmem:[%s223 + $0x30] sm:$0xff]
        %v233 = vld [vmem:[%s223 + $0x38] sm:$0xff]
        %v234 = vld [vmem:[%s223 + $0x40] sm:$0xff]
        %v235 = vld [vmem:[%s223 + $0x48] sm:$0xff]
        %v236 = vld [vmem:[%s223 + $0x50] sm:$0xff]
        %v237 = vld [vmem:[%s223 + $0x58] sm:$0xff]
        %v238 = vld [vmem:[%s223 + $0x60] sm:$0xff]
        %v239 = vld [vmem:[%s223 + $0x68] sm:$0xff]
        %v240 = vld [vmem:[%s223 + $0x70] sm:$0xff]
        %v241 = vld [vmem:[%s223 + $0x78] sm:$0xff]
        %v242 = vld [vmem:[%s1] sm:$0xff]
        %v243 = vld [vmem:[%s1 + $0x8] sm:$0xff]
        %v244 = vld [vmem:[%s1 + $0x10] sm:$0xff]
        %v245 = vld [vmem:[%s1 + $0x18] sm:$0xff]
        %v246 = vld [vmem:[%s2] sm:$0x1]
        %v248 = vlaneseq
        %v249 = vshrl.u32 %v248, 7
        %v250 = vsub.s32 0, %v249
        %v251 = vrot.slane %v246, %v250
        %vm253 = vcmask 261120
        %v255 = vsel %vm253, %v226, 0
        %v258 = vsel %vm253, %v227, 0
        %v261 = vsel %vm253, %v228, 0
        %v264 = vsel %vm253, %v229, 0
        %v267 = vsel %vm253, %v230, 0
        %v270 = vsel %vm253, %v231, 0
        %v273 = vsel %vm253, %v232, 0
        %v276 = vsel %vm253, %v233, 0
        %v279 = vsel %vm253, %v234, 0
        %v282 = vsel %vm253, %v235, 0
        %v285 = vsel %vm253, %v236, 0
        %v288 = vsel %vm253, %v237, 0
        %v291 = vsel %vm253, %v238, 0
        %v294 = vsel %vm253, %v239, 0
        %v297 = vsel %vm253, %v240, 0
        %v300 = vsel %vm253, %v241, 0
        %302 = vmatprep.subr.mxu0 0.0
        %303 = vmatpush1.msra.mxu0 0.0
        %304 = vmatprep.subr.mxu0 0.0
        %305 = vmatpush1.msra.mxu0 0.0
        %306 = vmatprep.subr.mxu0 0.0
        %307 = vmatpush1.msra.mxu0 0.0
        %308 = vmatprep.subr.mxu0 0.0
        %309 = vmatpush1.msra.mxu0 0.0
        %310 = vmatprep.subr.mxu0 0.0
        %311 = vmatpush1.msra.mxu0 0.0
        %312 = vmatprep.subr.mxu0 0.0
        %313 = vmatpush1.msra.mxu0 0.0
        %314 = vmatprep.subr.mxu0 0.0
        %315 = vmatpush1.msra.mxu0 0.0
        %316 = vmatprep.subr.mxu0 0.0
        %317 = vmatpush1.msra.mxu0 0.0
        %318 = vmatprep.subr.mxu0 0.0
        %319 = vmatpush1.msra.mxu0 0.0
        %320 = vmatprep.subr.mxu0 0.0
        %321 = vmatpush1.msra.mxu0 0.0
        %322 = vmatprep.subr.mxu0 0.0
        %323 = vmatpush1.msra.mxu0 0.0
        %324 = vmatprep.subr.mxu0 0.0
        %325 = vmatpush1.msra.mxu0 0.0
        %326 = vmatprep.subr.mxu0 0.0
        %327 = vmatpush1.msra.mxu0 %v245
        %328 = vmatprep.subr.mxu0 0.0
        %329 = vmatpush1.msra.mxu0 %v244
        %330 = vmatprep.subr.mxu0 0.0
        %331 = vmatpush1.msra.mxu0 %v243
        %332 = vmatprep.subr.mxu0 0.0
        %333 = vmatpush1.msra.mxu0 %v242
        %334 = vmatprep.subr.mxu0 0.0
        %335 = vmatpush2.msra.mxu0 0.0
        %336 = vmatprep.subr.mxu0 0.0
        %337 = vmatpush2.msra.mxu0 0.0
        %338 = vmatprep.subr.mxu0 0.0
        %339 = vmatpush2.msra.mxu0 0.0
        %340 = vmatprep.subr.mxu0 0.0
        %341 = vmatpush2.msra.mxu0 0.0
        %342 = vmatprep.subr.mxu0 0.0
        %343 = vmatpush2.msra.mxu0 0.0
        %344 = vmatprep.subr.mxu0 0.0
        %345 = vmatpush2.msra.mxu0 0.0
        %346 = vmatprep.subr.mxu0 0.0
        %347 = vmatpush2.msra.mxu0 0.0
        %348 = vmatprep.subr.mxu0 0.0
        %349 = vmatpush2.msra.mxu0 0.0
        %350 = vmatprep.subr.mxu0 0.0
        %351 = vmatpush2.msra.mxu0 0.0
        %352 = vmatprep.subr.mxu0 0.0
        %353 = vmatpush2.msra.mxu0 0.0
        %354 = vmatprep.subr.mxu0 0.0
        %355 = vmatpush2.msra.mxu0 0.0
        %356 = vmatprep.subr.mxu0 0.0
        %357 = vmatpush2.msra.mxu0 0.0
        %358 = vmatprep.subr.mxu0 0.0
        %359 = vmatpush2.msra.mxu0 0.0
        %360 = vmatprep.subr.mxu0 0.0
        %361 = vmatpush2.msra.mxu0 0.0
        %362 = vmatprep.subr.mxu0 0.0
        %363 = vmatpush2.msra.mxu0 0.0
        %364 = vmatprep.subr.mxu0 0.0
        %365 = vmatpush2.msra.mxu0 0.0
        %366 = vmatprep.mubr.f32.mxu0 0.0
        %367 = vmatmul.mubr.f32.gmra.mxu0 %v255
        %v368 = vpop.f32.mrf.mxu0
        %v369 = vadd.f32 %v251, %v368
        %v370 = vpop.f32.mrf.mxu0
        %371 = vmatprep.mubr.f32.mxu0 0.0
        %372 = vmatmul.mubr.f32.gmra.mxu0 %v258
        %v373 = vpop.f32.mrf.mxu0
        %v374 = vadd.f32 %v251, %v373
        %v375 = vpop.f32.mrf.mxu0
        %376 = vmatprep.mubr.f32.mxu0 0.0
        %377 = vmatmul.mubr.f32.gmra.mxu0 %v261
        %v378 = vpop.f32.mrf.mxu0
        %v379 = vadd.f32 %v251, %v378
        %v380 = vpop.f32.mrf.mxu0
        %381 = vmatprep.mubr.f32.mxu0 0.0
        %382 = vmatmul.mubr.f32.gmra.mxu0 %v264
        %v383 = vpop.f32.mrf.mxu0
        %v384 = vadd.f32 %v251, %v383
        %v385 = vpop.f32.mrf.mxu0
        %386 = vmatprep.mubr.f32.mxu0 0.0
        %387 = vmatmul.mubr.f32.gmra.mxu0 %v267
        %v388 = vpop.f32.mrf.mxu0
        %v389 = vadd.f32 %v251, %v388
        %v390 = vpop.f32.mrf.mxu0
        %391 = vmatprep.mubr.f32.mxu0 0.0
        %392 = vmatmul.mubr.f32.gmra.mxu0 %v270
        %v393 = vpop.f32.mrf.mxu0
        %v394 = vadd.f32 %v251, %v393
        %v395 = vpop.f32.mrf.mxu0
        %396 = vmatprep.mubr.f32.mxu0 0.0
        %397 = vmatmul.mubr.f32.gmra.mxu0 %v273
        %v398 = vpop.f32.mrf.mxu0
        %v399 = vadd.f32 %v251, %v398
        %v400 = vpop.f32.mrf.mxu0
        %401 = vmatprep.mubr.f32.mxu0 0.0
        %402 = vmatmul.mubr.f32.gmra.mxu0 %v276
        %v403 = vpop.f32.mrf.mxu0
        %v404 = vadd.f32 %v251, %v403
        %v405 = vpop.f32.mrf.mxu0
        %406 = vmatprep.mubr.f32.mxu0 0.0
        %407 = vmatmul.mubr.f32.gmra.mxu0 %v279
        %v408 = vpop.f32.mrf.mxu0
        %v409 = vadd.f32 %v251, %v408
        %v410 = vpop.f32.mrf.mxu0
        %411 = vmatprep.mubr.f32.mxu0 0.0
        %412 = vmatmul.mubr.f32.gmra.mxu0 %v282
        %v413 = vpop.f32.mrf.mxu0
        %v414 = vadd.f32 %v251, %v413
        %v415 = vpop.f32.mrf.mxu0
        %416 = vmatprep.mubr.f32.mxu0 0.0
        %417 = vmatmul.mubr.f32.gmra.mxu0 %v285
        %v418 = vpop.f32.mrf.mxu0
        %v419 = vadd.f32 %v251, %v418
        %v420 = vpop.f32.mrf.mxu0
        %421 = vmatprep.mubr.f32.mxu0 0.0
        %422 = vmatmul.mubr.f32.gmra.mxu0 %v288
        %v423 = vpop.f32.mrf.mxu0
        %v424 = vadd.f32 %v251, %v423
        %v425 = vpop.f32.mrf.mxu0
        %426 = vmatprep.mubr.f32.mxu0 0.0
        %427 = vmatmul.mubr.f32.gmra.mxu0 %v291
        %v428 = vpop.f32.mrf.mxu0
        %v429 = vadd.f32 %v251, %v428
        %v430 = vpop.f32.mrf.mxu0
        %431 = vmatprep.mubr.f32.mxu0 0.0
        %432 = vmatmul.mubr.f32.gmra.mxu0 %v294
        %v433 = vpop.f32.mrf.mxu0
        %v434 = vadd.f32 %v251, %v433
        %v435 = vpop.f32.mrf.mxu0
        %436 = vmatprep.mubr.f32.mxu0 0.0
        %437 = vmatmul.mubr.f32.gmra.mxu0 %v297
        %v438 = vpop.f32.mrf.mxu0
        %v439 = vadd.f32 %v251, %v438
        %v440 = vpop.f32.mrf.mxu0
        %441 = vmatprep.mubr.f32.mxu0 0.0
        %442 = vmatmul.mubr.f32.gmra.mxu0 %v300
        %v443 = vpop.f32.mrf.mxu0
        %v444 = vadd.f32 %v251, %v443
        %v445 = vpop.f32.mrf.mxu0
        %446 = vdwg.mxu0
        %v447 = vmax.f32 %v369, 0.0
        %v448 = vmax.f32 %v374, 0.0
        %v449 = vmax.f32 %v379, 0.0
        %v450 = vmax.f32 %v384, 0.0
        %v451 = vmax.f32 %v389, 0.0
        %v452 = vmax.f32 %v394, 0.0
        %v453 = vmax.f32 %v399, 0.0
        %v454 = vmax.f32 %v404, 0.0
        %v455 = vmax.f32 %v409, 0.0
        %v456 = vmax.f32 %v414, 0.0
        %v457 = vmax.f32 %v419, 0.0
        %v458 = vmax.f32 %v424, 0.0
        %v459 = vmax.f32 %v429, 0.0
        %v460 = vmax.f32 %v434, 0.0
        %v461 = vmax.f32 %v439, 0.0
        %v462 = vmax.f32 %v444, 0.0
        %v463 = vld [vmem:[%s3] sm:$0xff]
        %v464 = vld [vmem:[%s3 + $0x8] sm:$0xff]
        %v465 = vld [vmem:[%s3 + $0x10] sm:$0xff]
        %v466 = vld [vmem:[%s3 + $0x18] sm:$0xff]
        %v467 = vld [vmem:[%s3 + $0x20] sm:$0xff]
        %v468 = vld [vmem:[%s3 + $0x28] sm:$0xff]
        %v469 = vld [vmem:[%s3 + $0x30] sm:$0xff]
        %v470 = vld [vmem:[%s3 + $0x38] sm:$0xff]
        %v471 = vld [vmem:[%s3 + $0x40] sm:$0xff]
        %v472 = vld [vmem:[%s3 + $0x48] sm:$0xff]
        %v473 = vld [vmem:[%s3 + $0x50] sm:$0xff]
        %v474 = vld [vmem:[%s3 + $0x58] sm:$0xff]
        %v475 = vld [vmem:[%s3 + $0x60] sm:$0xff]
        %v476 = vld [vmem:[%s3 + $0x68] sm:$0xff]
        %v477 = vld [vmem:[%s3 + $0x70] sm:$0xff]
        %v478 = vld [vmem:[%s3 + $0x78] sm:$0xff]
        %v479 = vld [vmem:[%s4] sm:$0x1]
        %v481 = vlaneseq
        %v482 = vshrl.u32 %v481, 7
        %v483 = vsub.s32 0, %v482
        %v484 = vrot.slane %v479, %v483
        %486 = vmatprep.subr.mxu0 0.0
        %487 = vmatpush1.msra.mxu0 %v478
        %488 = vmatprep.subr.mxu0 0.0
        %489 = vmatpush1.msra.mxu0 %v477
        %490 = vmatprep.subr.mxu0 0.0
        %491 = vmatpush1.msra.mxu0 %v476
        %492 = vmatprep.subr.mxu0 0.0
        %493 = vmatpush1.msra.mxu0 %v475
        %494 = vmatprep.subr.mxu0 0.0
        %495 = vmatpush1.msra.mxu0 %v474
        %496 = vmatprep.subr.mxu0 0.0
        %497 = vmatpush1.msra.mxu0 %v473
        %498 = vmatprep.subr.mxu0 0.0
        %499 = vmatpush1.msra.mxu0 %v472
        %500 = vmatprep.subr.mxu0 0.0
        %501 = vmatpush1.msra.mxu0 %v471
        %502 = vmatprep.subr.mxu0 0.0
        %503 = vmatpush1.msra.mxu0 %v470
        %504 = vmatprep.subr.mxu0 0.0
        %505 = vmatpush1.msra.mxu0 %v469
        %506 = vmatprep.subr.mxu0 0.0
        %507 = vmatpush1.msra.mxu0 %v468
        %508 = vmatprep.subr.mxu0 0.0
        %509 = vmatpush1.msra.mxu0 %v467
        %510 = vmatprep.subr.mxu0 0.0
        %511 = vmatpush1.msra.mxu0 %v466
        %512 = vmatprep.subr.mxu0 0.0
        %513 = vmatpush1.msra.mxu0 %v465
        %514 = vmatprep.subr.mxu0 0.0
        %515 = vmatpush1.msra.mxu0 %v464
        %516 = vmatprep.subr.mxu0 0.0
        %517 = vmatpush1.msra.mxu0 %v463
        %518 = vmatprep.subr.mxu0 0.0
        %519 = vmatpush2.msra.mxu0 0.0
        %520 = vmatprep.subr.mxu0 0.0
        %521 = vmatpush2.msra.mxu0 0.0
        %522 = vmatprep.subr.mxu0 0.0
        %523 = vmatpush2.msra.mxu0 0.0
        %524 = vmatprep.subr.mxu0 0.0
        %525 = vmatpush2.msra.mxu0 0.0
        %526 = vmatprep.subr.mxu0 0.0
        %527 = vmatpush2.msra.mxu0 0.0
        %528 = vmatprep.subr.mxu0 0.0
        %529 = vmatpush2.msra.mxu0 0.0
        %530 = vmatprep.subr.mxu0 0.0
        %531 = vmatpush2.msra.mxu0 0.0
        %532 = vmatprep.subr.mxu0 0.0
        %533 = vmatpush2.msra.mxu0 0.0
        %534 = vmatprep.subr.mxu0 0.0
        %535 = vmatpush2.msra.mxu0 0.0
        %536 = vmatprep.subr.mxu0 0.0
        %537 = vmatpush2.msra.mxu0 0.0
        %538 = vmatprep.subr.mxu0 0.0
        %539 = vmatpush2.msra.mxu0 0.0
        %540 = vmatprep.subr.mxu0 0.0
        %541 = vmatpush2.msra.mxu0 0.0
        %542 = vmatprep.subr.mxu0 0.0
        %543 = vmatpush2.msra.mxu0 0.0
        %544 = vmatprep.subr.mxu0 0.0
        %545 = vmatpush2.msra.mxu0 0.0
        %546 = vmatprep.subr.mxu0 0.0
        %547 = vmatpush2.msra.mxu0 0.0
        %548 = vmatprep.subr.mxu0 0.0
        %549 = vmatpush2.msra.mxu0 0.0
        %550 = vmatprep.mubr.f32.mxu0 0.0
        %551 = vmatmul.mubr.f32.gmra.mxu0 %v447
        %v552 = vpop.f32.mrf.mxu0
        %v553 = vadd.f32 %v484, %v552
        %v554 = vpop.f32.mrf.mxu0
        %555 = vmatprep.mubr.f32.mxu0 0.0
        %556 = vmatmul.mubr.f32.gmra.mxu0 %v448
        %v557 = vpop.f32.mrf.mxu0
        %v558 = vadd.f32 %v484, %v557
        %v559 = vpop.f32.mrf.mxu0
        %560 = vmatprep.mubr.f32.mxu0 0.0
        %561 = vmatmul.mubr.f32.gmra.mxu0 %v449
        %v562 = vpop.f32.mrf.mxu0
        %v563 = vadd.f32 %v484, %v562
        %v564 = vpop.f32.mrf.mxu0
        %565 = vmatprep.mubr.f32.mxu0 0.0
        %566 = vmatmul.mubr.f32.gmra.mxu0 %v450
        %v567 = vpop.f32.mrf.mxu0
        %v568 = vadd.f32 %v484, %v567
        %v569 = vpop.f32.mrf.mxu0
        %570 = vmatprep.mubr.f32.mxu0 0.0
        %571 = vmatmul.mubr.f32.gmra.mxu0 %v451
        %v572 = vpop.f32.mrf.mxu0
        %v573 = vadd.f32 %v484, %v572
        %v574 = vpop.f32.mrf.mxu0
        %575 = vmatprep.mubr.f32.mxu0 0.0
        %576 = vmatmul.mubr.f32.gmra.mxu0 %v452
        %v577 = vpop.f32.mrf.mxu0
        %v578 = vadd.f32 %v484, %v577
        %v579 = vpop.f32.mrf.mxu0
        %580 = vmatprep.mubr.f32.mxu0 0.0
        %581 = vmatmul.mubr.f32.gmra.mxu0 %v453
        %v582 = vpop.f32.mrf.mxu0
        %v583 = vadd.f32 %v484, %v582
        %v584 = vpop.f32.mrf.mxu0
        %585 = vmatprep.mubr.f32.mxu0 0.0
        %586 = vmatmul.mubr.f32.gmra.mxu0 %v454
        %v587 = vpop.f32.mrf.mxu0
        %v588 = vadd.f32 %v484, %v587
        %v589 = vpop.f32.mrf.mxu0
        %590 = vmatprep.mubr.f32.mxu0 0.0
        %591 = vmatmul.mubr.f32.gmra.mxu0 %v455
        %v592 = vpop.f32.mrf.mxu0
        %v593 = vadd.f32 %v484, %v592
        %v594 = vpop.f32.mrf.mxu0
        %595 = vmatprep.mubr.f32.mxu0 0.0
        %596 = vmatmul.mubr.f32.gmra.mxu0 %v456
        %v597 = vpop.f32.mrf.mxu0
        %v598 = vadd.f32 %v484, %v597
        %v599 = vpop.f32.mrf.mxu0
        %600 = vmatprep.mubr.f32.mxu0 0.0
        %601 = vmatmul.mubr.f32.gmra.mxu0 %v457
        %v602 = vpop.f32.mrf.mxu0
        %v603 = vadd.f32 %v484, %v602
        %v604 = vpop.f32.mrf.mxu0
        %605 = vmatprep.mubr.f32.mxu0 0.0
        %606 = vmatmul.mubr.f32.gmra.mxu0 %v458
        %v607 = vpop.f32.mrf.mxu0
        %v608 = vadd.f32 %v484, %v607
        %v609 = vpop.f32.mrf.mxu0
        %610 = vmatprep.mubr.f32.mxu0 0.0
        %611 = vmatmul.mubr.f32.gmra.mxu0 %v459
        %v612 = vpop.f32.mrf.mxu0
        %v613 = vadd.f32 %v484, %v612
        %v614 = vpop.f32.mrf.mxu0
        %615 = vmatprep.mubr.f32.mxu0 0.0
        %616 = vmatmul.mubr.f32.gmra.mxu0 %v460
        %v617 = vpop.f32.mrf.mxu0
        %v618 = vadd.f32 %v484, %v617
        %v619 = vpop.f32.mrf.mxu0
        %620 = vmatprep.mubr.f32.mxu0 0.0
        %621 = vmatmul.mubr.f32.gmra.mxu0 %v461
        %v622 = vpop.f32.mrf.mxu0
        %v623 = vadd.f32 %v484, %v622
        %v624 = vpop.f32.mrf.mxu0
        %625 = vmatprep.mubr.f32.mxu0 0.0
        %626 = vmatmul.mubr.f32.gmra.mxu0 %v462
        %v627 = vpop.f32.mrf.mxu0
        %v628 = vadd.f32 %v484, %v627
        %v629 = vpop.f32.mrf.mxu0
        %630 = vdwg.mxu0
        %631 = vst [vmem:[%s218] sm:$0xff] %v553
        %632 = vst [vmem:[%s218 + $0x8] sm:$0xff] %v558
        %633 = vst [vmem:[%s218 + $0x10] sm:$0xff] %v563
        %634 = vst [vmem:[%s218 + $0x18] sm:$0xff] %v568
        %635 = vst [vmem:[%s218 + $0x20] sm:$0xff] %v573
        %636 = vst [vmem:[%s218 + $0x28] sm:$0xff] %v578
        %637 = vst [vmem:[%s218 + $0x30] sm:$0xff] %v583
        %638 = vst [vmem:[%s218 + $0x38] sm:$0xff] %v588
        %639 = vst [vmem:[%s218 + $0x40] sm:$0xff] %v593
        %640 = vst [vmem:[%s218 + $0x48] sm:$0xff] %v598
        %641 = vst [vmem:[%s218 + $0x50] sm:$0xff] %v603
        %642 = vst [vmem:[%s218 + $0x58] sm:$0xff] %v608
        %643 = vst [vmem:[%s218 + $0x60] sm:$0xff] %v613
        %644 = vst [vmem:[%s218 + $0x68] sm:$0xff] %v618
        %645 = vst [vmem:[%s218 + $0x70] sm:$0xff] %v623
        %646 = vst [vmem:[%s218 + $0x78] sm:$0xff] %v628
        %s647 = sand.u32 %s137, 1
        %s648 = scalar_lea.sflag [#allocation3], %s647
        %s649 = sand.u32 %s137, 1
        %s650 = smul.addr %s649, 128
        %s651 = scalar_lea.vmem [#allocation2], %s650
        // Predicated region
        $region41: #{tpu_custom_call.1} parent=39 // pred_check
          %p652 = pneg %p147
        $region42: #{tpu_custom_call.1} parent=39 // pred_check_branch
          %654 = sbr.rel (%p652) target = $region44
        $region43: #{tpu_custom_call.1} parent=39 // pred_region
          %s655 = smul.u32 16, %s19
          %s657 = ssub.s32 2048, 2048
          %658 = vsyncadd %s648, %s657
          %s659 = smul.addr %s655, 128
          %s660 = scalar_lea.hbm %s5, %s659
          %s661 = sshll.u32 %s651, 4
          %s662 = int_to_ptr.vmem [resolvable:$true] %s661
          %667 = dma.vmem_to_hbm [thread:$0]  %s662, 2048, %s660, %s648, 128, 128, 8
        $region44: #{tpu_custom_call.1} parent=39 // pred_fallthru
          _
      $region40: #{tpu_custom_call.1} parent=5 // pred_fallthru
        _
      %p668 = scmp.le.s32.totalorder 2, %s14
      // Predicated region
      $region45: #{tpu_custom_call.1} parent=5 // pred_check
        %p669 = pneg %p668
      $region46: #{tpu_custom_call.1} parent=5 // pred_check_branch
        %671 = sbr.rel (%p669) target = $region48
      $region47: #{tpu_custom_call.1} parent=5 // pred_region
        %s672 = ssub.s32 %s14, 2
        // Predicated region
        $region49: #{tpu_custom_call.1} parent=47 // pred_check
          %p673 = pneg %p153
        $region50: #{tpu_custom_call.1} parent=47 // pred_check_branch
          %675 = sbr.rel (%p673) target = $region52
        $region51: #{tpu_custom_call.1} parent=47 // pred_region
          %s676 = sand.u32 %s138, 1
          %s677 = scalar_lea.sflag [#allocation3], %s676
          %s678 = sand.u32 %s138, 1
          %s679 = smul.addr %s678, 128
          %s680 = scalar_lea.vmem [#allocation2], %s679
          %681 = dma.done %s677, 2048
        $region52: #{tpu_custom_call.1} parent=47 // pred_fallthru
          _
      $region48: #{tpu_custom_call.1} parent=5 // pred_fallthru
        _
    $region6: #{tpu_custom_call.1} parent=1 // loop_footer
      %s18 = sadd.s32 1, %s14
    $region7: #{tpu_custom_call.1} parent=1 // loop_footer_branch
      %13 = sbr.rel target = $region3
    $region8: #{tpu_custom_call.1} parent=1 // loop_exit
      _
    %682 = vsyncpa [#allocation3], 1
    %s683 = scalar_lea.sflag [#allocation3], 1
    %684 = vsyncpa %s683, 1

</llo_original>
